<compile_context>
chip_gen: v7x
topology: tpu7x:2x2x1
jax: 0.10.0
libtpu: 0.0.40
codegen_flags: <defaults>
</compile_context>

<pallas_src>
import functools

import jax
import jax.numpy as jnp
from jax.experimental import pallas as pl
from jax.experimental.pallas import tpu as pltpu


def _round_up(x, m):
    return (x + m - 1) // m * m


def _vmem_capacity_bytes():
    """Physical VMEM per TensorCore (128 MiB on v5e/v6e, 64 MiB on v7x)."""
    try:
        cap = getattr(pltpu.get_tpu_info(), "vmem_capacity_bytes", None)
        if cap:
            return int(cap)
    except Exception:
        pass
    return 64 * 1024 * 1024          # v7x-safe fallback


def pick_activation_dtype():
    """bf16 storage / MXU inputs on v6e & v7x (full bf16 VPU+MXU); f32 on v5e."""
    try:
        kind = jax.devices()[0].device_kind.lower()
    except Exception:
        return jnp.float32
    if "v6" in kind or "v7" in kind:
        return jnp.bfloat16
    return jnp.float32


def _pick_halo(TL, two_p):
    """Smallest multiple of 128 that is >= two_p and divides TL."""
    h = 128
    while h < two_p or TL % h != 0:
        h += 128
        if h >= TL:
            return TL
    return h


def _block_vmem_bytes(TL, HALO, p, K, C_in_p, C_out_p, act_bytes):
    """Rough per-grid-step VMEM footprint for one TemporalBlock."""
    io = 2 * (C_in_p * (TL + HALO) + C_out_p * TL) * act_bytes      # dbl-buffered
    w = 2 * (K * C_out_p * (C_in_p + C_out_p) + C_out_p * C_in_p) * act_bytes
    tmp = (C_in_p * (HALO + TL) + 3 * C_out_p * (TL + p)
           + 2 * C_out_p * TL) * 4                                  # f32 temporaries
    return io + w + tmp


# ----------------------------------------------------------------------------
# Pallas kernel: one TemporalBlock, one (batch, time-tile) grid step
# ----------------------------------------------------------------------------
def temporal_block_kernel(x_cur_ref, x_halo_ref, w1_ref, b1_ref, w2_ref,
                          b2_ref, *rest, K, dilation, TL, HALO,
                          has_downsample, mxu_dtype):
    if has_downsample:
        wd_ref, bd_ref, out_ref = rest
    else:
        (out_ref,) = rest

    p = (K - 1) * dilation
    TLE = TL + p                       # output tile + left halo for conv2's input
    t = pl.program_id(1)

    # ---- extended input tile in registers (no scratch round trips) ---------
    cur = x_cur_ref[0]                                   # (C_in_p, TL)
    halo = x_halo_ref[0]                                 # (C_in_p, HALO)
    halo = jnp.where(t > 0, halo, jnp.zeros_like(halo))  # conv1 causal zero pad @ t==0
    xe = jnp.concatenate([halo, cur], axis=-1)           # (C_in_p, HALO+TL), 128-aligned

    # ---- conv1 on TL+p columns (the extra p regenerate conv2's halo) -------
    acc1 = None
    for j in range(K):
        s = HALO - p - (K - 1 - j) * dilation            # static slice offset
        contrib = jnp.dot(w1_ref[j], xe[:, s:s + TLE],
                          preferred_element_type=jnp.float32)
        acc1 = contrib if acc1 is None else acc1 + contrib
    h1 = jnp.maximum(acc1 + b1_ref[...], 0.0)
    # conv2's causal zero padding: h1 columns before time 0 must be 0.
    col = jax.lax.broadcasted_iota(jnp.int32, h1.shape, 1)
    h1 = jnp.where(jnp.logical_or(t > 0, col >= p), h1, 0.0)
    # dropout1: identity (eval-mode forward)
    h1m = h1.astype(mxu_dtype)

    # ---- conv2 --------------------------------------------------------------
    acc2 = None
    for j in range(K):
        contrib = jnp.dot(w2_ref[j], h1m[:, j * dilation:j * dilation + TL],
                          preferred_element_type=jnp.float32)
        acc2 = contrib if acc2 is None else acc2 + contrib
    out = jnp.maximum(acc2 + b2_ref[...], 0.0)
    # dropout2: identity (eval-mode forward)

    # ---- residual branch + final ReLU ---------------------------------------
    if has_downsample:
        res = jnp.dot(wd_ref[...], cur,
                      preferred_element_type=jnp.float32) + bd_ref[...]
    else:
        res = cur.astype(jnp.float32)
    out_ref[0] = jnp.maximum(out + res, 0.0).astype(out_ref.dtype)


# ----------------------------------------------------------------------------
# Wrapper: one TemporalBlock as a pallas_call over grid (N, L_pad // TL)
# ----------------------------------------------------------------------------
def temporal_block(x, layer, *, K, TL, dtype, vmem_limit_bytes):
    N, C_in_p, L_pad = x.shape
    C_out_p = layer["w1"].shape[1]
    dilation = layer["dilation"]
    has_downsample = layer["has_downsample"]
    p = (K - 1) * dilation
    assert TL % 128 == 0 and L_pad % TL == 0
    HALO = _pick_halo(TL, 2 * p)           # narrow halo (prev-tile tail only)
    assert HALO <= TL and TL % HALO == 0
    r = TL // HALO
    T = L_pad // TL

    kernel = functools.partial(
        temporal_block_kernel, K=K, dilation=dilation, TL=TL, HALO=HALO,
        has_downsample=has_downsample, mxu_dtype=dtype)

    in_specs = [
        # current time tile
        pl.BlockSpec((1, C_in_p, TL), lambda n, t: (n, 0, t)),
        # last HALO columns of the previous tile (clamped at t==0, zero-masked
        # in-kernel) -- instead of re-DMAing the whole previous tile.
        pl.BlockSpec((1, C_in_p, HALO),
                     lambda n, t: (n, 0, jnp.maximum(t * r - 1, 0))),
        # grid-invariant weights / biases (biases stay f32)
        pl.BlockSpec((K, C_out_p, C_in_p), lambda n, t: (0, 0, 0)),
        pl.BlockSpec((C_out_p, 1), lambda n, t: (0, 0)),
        pl.BlockSpec((K, C_out_p, C_out_p), lambda n, t: (0, 0, 0)),
        pl.BlockSpec((C_out_p, 1), lambda n, t: (0, 0)),
    ]
    args = [x, x, layer["w1"], layer["b1"], layer["w2"], layer["b2"]]
    if has_downsample:
        in_specs += [pl.BlockSpec((C_out_p, C_in_p), lambda n, t: (0, 0)),
                     pl.BlockSpec((C_out_p, 1), lambda n, t: (0, 0))]
        args += [layer["wd"], layer["bd"]]

    itemsize = jnp.dtype(dtype).itemsize
    flops = 2 * N * L_pad * C_out_p * (
        K * (C_in_p + C_out_p) + (C_in_p if has_downsample else 0))
    bytes_accessed = itemsize * (N * L_pad * (C_in_p + C_out_p)
                                 + N * T * C_in_p * HALO
                                 + K * C_out_p * (C_in_p + C_out_p))
    cost = pl.CostEstimate(flops=flops, transcendentals=0,
                           bytes_accessed=bytes_accessed)

    return pl.pallas_call(
        kernel,
        out_shape=jax.ShapeDtypeStruct((N, C_out_p, L_pad), dtype),
        grid_spec=pltpu.PrefetchScalarGridSpec(
            num_scalar_prefetch=0,
            grid=(N, T),
            in_specs=in_specs,
            out_specs=pl.BlockSpec((1, C_out_p, TL), lambda n, t: (n, 0, t))),
        compiler_params=pltpu.CompilerParams(
            dimension_semantics=("parallel", "parallel"),
            vmem_limit_bytes=vmem_limit_bytes),
        cost_estimate=cost,
    )(*args)


# ----------------------------------------------------------------------------
# Parameter construction (deterministic, synthetic)
# ----------------------------------------------------------------------------
def _weight_norm_init(v):
    # PyTorch weight_norm (dim=0): w = g * v / ||v|| with g init'd to ||v||,
    # so the effective weight at init equals v (guarded against zero norm).
    norm = jnp.sqrt(jnp.sum(v * v, axis=tuple(range(1, v.ndim)), keepdims=True))
    return v * (norm / jnp.maximum(norm, 1e-12))


def init_tcn_params(key, num_inputs, num_channels, kernel_size,
                    dtype=jnp.float32):
    mult = 8 if jnp.dtype(dtype).itemsize >= 4 else 16   # sublane multiple
    K = kernel_size
    params = []
    in_c = num_inputs
    for i, out_c in enumerate(num_channels):
        key, k1, k2, k3, k4, k5, k6 = jax.random.split(key, 7)
        w1 = _weight_norm_init(
            0.01 * jax.random.normal(k1, (out_c, in_c, K), jnp.float32))
        w2 = _weight_norm_init(
            0.01 * jax.random.normal(k2, (out_c, out_c, K), jnp.float32))
        b1 = 0.01 * jax.random.normal(k3, (out_c,), jnp.float32)
        b2 = 0.01 * jax.random.normal(k4, (out_c,), jnp.float32)
        has_downsample = (in_c != out_c)

        in_p = _round_up(in_c, mult)
        out_p = _round_up(out_c, mult)
        w1_p = jnp.zeros((out_p, in_p, K), jnp.float32).at[:out_c, :in_c].set(w1)
        w2_p = jnp.zeros((out_p, out_p, K), jnp.float32).at[:out_c, :out_c].set(w2)
        # per-tap layout (K, C_out_p, C_in_p): the kernel indexes w_ref[j]
        w1_t = jnp.transpose(w1_p, (2, 0, 1))
        w2_t = jnp.transpose(w2_p, (2, 0, 1))
        b1_p = jnp.zeros((out_p, 1), jnp.float32).at[:out_c, 0].set(b1)
        b2_p = jnp.zeros((out_p, 1), jnp.float32).at[:out_c, 0].set(b2)

        layer = dict(
            w1=w1_t.astype(dtype), b1=b1_p,
            w2=w2_t.astype(dtype), b2=b2_p,
            dilation=2 ** i, has_downsample=has_downsample, c_out=out_c,
            # unpadded f32 copies for the pure-JAX reference
            w1_ref=w1, b1_ref=b1, w2_ref=w2, b2_ref=b2)
        if has_downsample:
            wd = 0.01 * jax.random.normal(k5, (out_c, in_c), jnp.float32)
            bd = 0.01 * jax.random.normal(k6, (out_c,), jnp.float32)
            wd_p = jnp.zeros((out_p, in_p), jnp.float32).at[:out_c, :in_c].set(wd)
            bd_p = jnp.zeros((out_p, 1), jnp.float32).at[:out_c, 0].set(bd)
            layer.update(wd=wd_p.astype(dtype), bd=bd_p, wd_ref=wd, bd_ref=bd)
        params.append(layer)
        in_c = out_c
    return params


# ----------------------------------------------------------------------------
# Full network wrapper (pads once at the entry, slices once at the exit)
# ----------------------------------------------------------------------------
def temporal_conv_net(x, params, *, kernel_size, dtype=jnp.float32,
                      base_tile=None):
    # TODO(synk): nn.Dropout is stochastic in training mode; implemented as
    # identity (eval-mode forward).
    N, C_in, L = x.shape
    mult = 8 if jnp.dtype(dtype).itemsize >= 4 else 16
    K = kernel_size
    p_max = (K - 1) * max(lyr["dilation"] for lyr in params)
    act_bytes = jnp.dtype(dtype).itemsize

    vmem_cap = _vmem_capacity_bytes()
    vmem_limit = int(min(max(vmem_cap * 0.7, 32 * 2 ** 20), 112 * 2 ** 20))
    if base_tile is None:
        # v5e/v6e (128 MiB VMEM) -> large time tiles; v7x (64 MiB/TC) -> 512.
        base_tile = 1024 if vmem_cap >= 96 * 2 ** 20 else 512

    tl_min = _round_up(max(2 * p_max, 1), 128)    # halo must fit in one prev tile
    tl_pref = _round_up(max(8 * p_max, 1), 128)   # cap conv1 halo recompute ~12%
    TL = max(min(max(base_tile, tl_pref), _round_up(L, 128)), tl_min)

    # Shrink TL until the per-step footprint fits the VMEM budget.
    C_max = max([_round_up(C_in, mult)]
                + [_round_up(lyr["c_out"], mult) for lyr in params])
    budget = int(vmem_cap * 0.55)
    while (TL > tl_min
           and _block_vmem_bytes(TL, _pick_halo(TL, 2 * p_max), p_max, K,
                                 C_max, C_max, act_bytes) > budget):
        TL = max(tl_min, _round_up(TL // 2, 128))

    L_pad = _round_up(L, TL)
    C_in_p = _round_up(C_in, mult)

    h = jnp.zeros((N, C_in_p, L_pad), dtype).at[:, :C_in, :L].set(
        x.astype(dtype))
    for lyr in params:
        h = temporal_block(h, lyr, K=K, TL=TL, dtype=dtype,
                           vmem_limit_bytes=vmem_limit)
    return h[:, :params[-1]["c_out"], :L].astype(jnp.float32)


# ----------------------------------------------------------------------------
# Pure-JAX reference (same math, f32, HIGHEST precision) for correctness
# ----------------------------------------------------------------------------
def temporal_conv_net_ref(x, params, *, kernel_size):
    K = kernel_size
    hp = jax.lax.Precision.HIGHEST
    h = x
    for lyr in params:
        d = lyr["dilation"]
        pad = (K - 1) * d
        L = h.shape[2]

        def conv(xx, w, b):
            xp = jnp.pad(xx, ((0, 0), (0, 0), (pad, 0)))
            acc = sum(jnp.einsum("oc,ncl->nol", w[:, :, j],
                                 xp[:, :, j * d:j * d + L], precision=hp)
                      for j in range(K))
            return acc + b[None, :, None]

        h1 = jax.nn.relu(conv(h, lyr["w1_ref"], lyr["b1_ref"]))
        out = jax.nn.relu(conv(h1, lyr["w2_ref"], lyr["b2_ref"]))
        if lyr["has_downsample"]:
            res = (jnp.einsum("oc,ncl->nol", lyr["wd_ref"], h, precision=hp)
                   + lyr["bd_ref"][None, :, None])
        else:
            res = h
        h = jax.nn.relu(out + res)
    return h


# ----------------------------------------------------------------------------
if __name__ == "__main__":
    key = jax.random.PRNGKey(0)
    kernel_size = 2

    # --- Test A: small shapes, single time tile ------------------------------
    num_inputs, num_channels = 4, [8, 8]
    N, L = 2, 16
    key, kx, kp = jax.random.split(key, 3)
    x = jax.random.normal(kx, (N, num_inputs, L), jnp.float32)   # NCL layout

    params32 = init_tcn_params(kp, num_inputs, num_channels, kernel_size,
                               dtype=jnp.float32)
    y32 = jax.block_until_ready(
        temporal_conv_net(x, params32, kernel_size=kernel_size,
                          dtype=jnp.float32))
    y_ref = temporal_conv_net_ref(x, params32, kernel_size=kernel_size)
    assert y32.shape == (N, num_channels[-1], L)
    assert jnp.allclose(y32, y_ref, atol=3e-5, rtol=3e-5), "f32 mismatch (A)"

    # bf16 storage + bf16 MXU inputs (v6e/v7x fast path): loose check
    params16 = init_tcn_params(kp, num_inputs, num_channels, kernel_size,
                               dtype=jnp.bfloat16)
    y16 = jax.block_until_ready(
        temporal_conv_net(x, params16, kernel_size=kernel_size,
                          dtype=jnp.bfloat16))
    assert y16.shape == (N, num_channels[-1], L)
    assert jnp.allclose(y16, y_ref, atol=5e-2, rtol=5e-2), "bf16 mismatch (A)"

    # --- Test B: multiple time tiles (exercises halo / t>0 / t==0 masking) ---
    num_inputs_b, num_channels_b = 4, [8, 16, 16]
    N_b, L_b = 2, 300
    key, kxb, kpb = jax.random.split(key, 3)
    xb = jax.random.normal(kxb, (N_b, num_inputs_b, L_b), jnp.float32)
    params_b = init_tcn_params(kpb, num_inputs_b, num_channels_b, kernel_size,
                               dtype=jnp.float32)
    yb = jax.block_until_ready(
        temporal_conv_net(xb, params_b, kernel_size=kernel_size,
                          dtype=jnp.float32, base_tile=128))
    yb_ref = temporal_conv_net_ref(xb, params_b, kernel_size=kernel_size)
    assert yb.shape == (N_b, num_channels_b[-1], L_b)
    assert jnp.allclose(yb, yb_ref, atol=3e-5, rtol=3e-5), "f32 mismatch (B)"

    print("KERNEL_OK")
</pallas_src>

<mosaic_0001>
module attributes {stable_mosaic.version = 11 : i64} {
  func.func @temporal_block_kernel(%arg0: i32, %arg1: i32, %arg2: memref<1x8x128xf32, #tpu.memory_space<vmem>>, %arg3: memref<1x8x128xf32, #tpu.memory_space<vmem>>, %arg4: memref<2x8x8xf32, #tpu.memory_space<vmem>>, %arg5: memref<8x1xf32, #tpu.memory_space<vmem>>, %arg6: memref<2x8x8xf32, #tpu.memory_space<vmem>>, %arg7: memref<8x1xf32, #tpu.memory_space<vmem>>, %arg8: memref<8x8xf32, #tpu.memory_space<vmem>>, %arg9: memref<8x1xf32, #tpu.memory_space<vmem>>, %arg10: memref<1x8x128xf32, #tpu.memory_space<vmem>>) attributes {dimension_semantics = [#tpu.dimension_semantics<parallel>, #tpu.dimension_semantics<parallel>], iteration_bounds = array<i64: 2, 1>, scalar_prefetch = 0 : i64, scratch_operands = 0 : i64, tpu.core_type = #tpu.core_type<tc>, window_params = [{transform_indices = @transform_0, window_bounds = array<i64: 1, 8, 128>}, {transform_indices = @transform_1, window_bounds = array<i64: 1, 8, 128>}, {pipeline_mode = #tpu.pipeline_mode<synchronous>, transform_indices = @transform_2, window_bounds = array<i64: 2, 8, 8>}, {pipeline_mode = #tpu.pipeline_mode<synchronous>, transform_indices = @transform_3, window_bounds = array<i64: 8, 1>}, {pipeline_mode = #tpu.pipeline_mode<synchronous>, transform_indices = @transform_4, window_bounds = array<i64: 2, 8, 8>}, {pipeline_mode = #tpu.pipeline_mode<synchronous>, transform_indices = @transform_5, window_bounds = array<i64: 8, 1>}, {pipeline_mode = #tpu.pipeline_mode<synchronous>, transform_indices = @transform_6, window_bounds = array<i64: 8, 8>}, {pipeline_mode = #tpu.pipeline_mode<synchronous>, transform_indices = @transform_7, window_bounds = array<i64: 8, 1>}, {transform_indices = @transform_8, window_bounds = array<i64: 1, 8, 128>}]} {
    %c0 = arith.constant 0 : index
    %c0_0 = arith.constant 0 : index
    %c0_1 = arith.constant 0 : index
    %0 = vector.load %arg2[%c0, %c0_0, %c0_1] : memref<1x8x128xf32, #tpu.memory_space<vmem>>, vector<1x8x128xf32>
    %1 = vector.shape_cast %0 : vector<1x8x128xf32> to vector<8x128xf32>
    %c0_2 = arith.constant 0 : index
    %c0_3 = arith.constant 0 : index
    %c0_4 = arith.constant 0 : index
    %2 = vector.load %arg3[%c0_2, %c0_3, %c0_4] : memref<1x8x128xf32, #tpu.memory_space<vmem>>, vector<1x8x128xf32>
    %3 = vector.shape_cast %2 : vector<1x8x128xf32> to vector<8x128xf32>
    %c0_i32 = arith.constant 0 : i32
    %4 = arith.cmpi sgt, %arg1, %c0_i32 : i32
    %cst = arith.constant 0.000000e+00 : f32
    %5 = vector.broadcast %cst : f32 to vector<8x128xf32>
    %6 = arith.select %4, %3, %5 : vector<8x128xf32>
    %7 = tpu.concatenate %6, %1 in 1 : vector<8x128xf32>, vector<8x128xf32> -> vector<8x256xf32>
    %c0_5 = arith.constant 0 : index
    %c0_6 = arith.constant 0 : index
    %c0_7 = arith.constant 0 : index
    %8 = vector.load %arg4[%c0_5, %c0_6, %c0_7] : memref<2x8x8xf32, #tpu.memory_space<vmem>>, vector<1x8x8xf32>
    %9 = vector.shape_cast %8 : vector<1x8x8xf32> to vector<8x8xf32>
    %10 = vector.extract_strided_slice %7 {offsets = [0, 126], sizes = [8, 129], strides = [1, 1]} : vector<8x256xf32> to vector<8x129xf32>
    %cst_8 = arith.constant dense<0.000000e+00> : vector<8x129xf32>
    %11 = tpu.matmul %9, %10, %cst_8 {dimension_numbers = #tpu.dot_dimension_numbers<[1], [0], [0], [1], [0, 0, 1, 1], [], []>} : vector<8x8xf32>, vector<8x129xf32>, vector<8x129xf32> -> vector<8x129xf32>
    %c1 = arith.constant 1 : index
    %c0_9 = arith.constant 0 : index
    %c0_10 = arith.constant 0 : index
    %12 = vector.load %arg4[%c1, %c0_9, %c0_10] : memref<2x8x8xf32, #tpu.memory_space<vmem>>, vector<1x8x8xf32>
    %13 = vector.shape_cast %12 : vector<1x8x8xf32> to vector<8x8xf32>
    %14 = vector.extract_strided_slice %7 {offsets = [0, 127], sizes = [8, 129], strides = [1, 1]} : vector<8x256xf32> to vector<8x129xf32>
    %cst_11 = arith.constant dense<0.000000e+00> : vector<8x129xf32>
    %15 = tpu.matmul %13, %14, %cst_11 {dimension_numbers = #tpu.dot_dimension_numbers<[1], [0], [0], [1], [0, 0, 1, 1], [], []>} : vector<8x8xf32>, vector<8x129xf32>, vector<8x129xf32> -> vector<8x129xf32>
    %16 = arith.addf %11, %15 : vector<8x129xf32>
    %c0_12 = arith.constant 0 : index
    %c0_13 = arith.constant 0 : index
    %17 = vector.load %arg5[%c0_12, %c0_13] : memref<8x1xf32, #tpu.memory_space<vmem>>, vector<8x1xf32>
    %18 = vector.broadcast %17 : vector<8x1xf32> to vector<8x129xf32>
    %19 = arith.addf %16, %18 : vector<8x129xf32>
    %cst_14 = arith.constant 0.000000e+00 : f32
    %20 = vector.broadcast %cst_14 : f32 to vector<8x129xf32>
    %21 = arith.maximumf %19, %20 : vector<8x129xf32>
    %22 = tpu.iota {dimensions = array<i32: 1>} : vector<8x129xi32>
    %c0_i32_15 = arith.constant 0 : i32
    %23 = arith.cmpi sgt, %arg1, %c0_i32_15 : i32
    %c1_i32 = arith.constant 1 : i32
    %24 = vector.broadcast %c1_i32 : i32 to vector<8x129xi32>
    %25 = arith.cmpi sge, %22, %24 : vector<8x129xi32>
    %26 = vector.broadcast %23 : i1 to vector<8x129xi1>
    %27 = arith.ori %26, %25 : vector<8x129xi1>
    %cst_16 = arith.constant 0.000000e+00 : f32
    %28 = vector.broadcast %cst_16 : f32 to vector<8x129xf32>
    %29 = arith.select %27, %21, %28 : vector<8x129xi1>, vector<8x129xf32>
    %c0_17 = arith.constant 0 : index
    %c0_18 = arith.constant 0 : index
    %c0_19 = arith.constant 0 : index
    %30 = vector.load %arg6[%c0_17, %c0_18, %c0_19] : memref<2x8x8xf32, #tpu.memory_space<vmem>>, vector<1x8x8xf32>
    %31 = vector.shape_cast %30 : vector<1x8x8xf32> to vector<8x8xf32>
    %32 = vector.extract_strided_slice %29 {offsets = [0, 0], sizes = [8, 128], strides = [1, 1]} : vector<8x129xf32> to vector<8x128xf32>
    %cst_20 = arith.constant dense<0.000000e+00> : vector<8x128xf32>
    %33 = tpu.matmul %31, %32, %cst_20 {dimension_numbers = #tpu.dot_dimension_numbers<[1], [0], [0], [1], [0, 0, 1, 1], [], []>} : vector<8x8xf32>, vector<8x128xf32>, vector<8x128xf32> -> vector<8x128xf32>
    %c1_21 = arith.constant 1 : index
    %c0_22 = arith.constant 0 : index
    %c0_23 = arith.constant 0 : index
    %34 = vector.load %arg6[%c1_21, %c0_22, %c0_23] : memref<2x8x8xf32, #tpu.memory_space<vmem>>, vector<1x8x8xf32>
    %35 = vector.shape_cast %34 : vector<1x8x8xf32> to vector<8x8xf32>
    %36 = vector.extract_strided_slice %29 {offsets = [0, 1], sizes = [8, 128], strides = [1, 1]} : vector<8x129xf32> to vector<8x128xf32>
    %cst_24 = arith.constant dense<0.000000e+00> : vector<8x128xf32>
    %37 = tpu.matmul %35, %36, %cst_24 {dimension_numbers = #tpu.dot_dimension_numbers<[1], [0], [0], [1], [0, 0, 1, 1], [], []>} : vector<8x8xf32>, vector<8x128xf32>, vector<8x128xf32> -> vector<8x128xf32>
    %38 = arith.addf %33, %37 : vector<8x128xf32>
    %c0_25 = arith.constant 0 : index
    %c0_26 = arith.constant 0 : index
    %39 = vector.load %arg7[%c0_25, %c0_26] : memref<8x1xf32, #tpu.memory_space<vmem>>, vector<8x1xf32>
    %40 = vector.broadcast %39 : vector<8x1xf32> to vector<8x128xf32>
    %41 = arith.addf %38, %40 : vector<8x128xf32>
    %cst_27 = arith.constant 0.000000e+00 : f32
    %42 = vector.broadcast %cst_27 : f32 to vector<8x128xf32>
    %43 = arith.maximumf %41, %42 : vector<8x128xf32>
    %c0_28 = arith.constant 0 : index
    %c0_29 = arith.constant 0 : index
    %44 = vector.load %arg8[%c0_28, %c0_29] : memref<8x8xf32, #tpu.memory_space<vmem>>, vector<8x8xf32>
    %cst_30 = arith.constant dense<0.000000e+00> : vector<8x128xf32>
    %45 = tpu.matmul %44, %1, %cst_30 {dimension_numbers = #tpu.dot_dimension_numbers<[1], [0], [0], [1], [0, 0, 1, 1], [], []>} : vector<8x8xf32>, vector<8x128xf32>, vector<8x128xf32> -> vector<8x128xf32>
    %c0_31 = arith.constant 0 : index
    %c0_32 = arith.constant 0 : index
    %46 = vector.load %arg9[%c0_31, %c0_32] : memref<8x1xf32, #tpu.memory_space<vmem>>, vector<8x1xf32>
    %47 = vector.broadcast %46 : vector<8x1xf32> to vector<8x128xf32>
    %48 = arith.addf %45, %47 : vector<8x128xf32>
    %49 = arith.addf %43, %48 : vector<8x128xf32>
    %cst_33 = arith.constant 0.000000e+00 : f32
    %50 = vector.broadcast %cst_33 : f32 to vector<8x128xf32>
    %51 = arith.maximumf %49, %50 : vector<8x128xf32>
    %c0_34 = arith.constant 0 : index
    %c0_35 = arith.constant 0 : index
    %c0_36 = arith.constant 0 : index
    %52 = vector.load %arg10[%c0_34, %c0_35, %c0_36] : memref<1x8x128xf32, #tpu.memory_space<vmem>>, vector<1x8x128xf32>
    %53 = vector.shape_cast %52 : vector<1x8x128xf32> to vector<8x128xf32>
    %54 = vector.shape_cast %51 : vector<8x128xf32> to vector<1x8x128xf32>
    tpu.vector_store %arg10[%c0_34, %c0_35, %c0_36], %54 {strides = array<i32>} : memref<1x8x128xf32, #tpu.memory_space<vmem>>, vector<1x8x128xf32>,
    return
  }
  func.func @transform_0(%arg0: i32, %arg1: i32) -> (i32, i32, i32) {
    %c0_i32 = arith.constant 0 : i32
    %c0_i32_0 = arith.constant 0 : i32
    return %arg0, %c0_i32, %arg1 : i32, i32, i32
  }
  func.func @transform_1(%arg0: i32, %arg1: i32) -> (i32, i32, i32) {
    %c1_i32 = arith.constant 1 : i32
    %0 = arith.muli %arg1, %c1_i32 : i32
    %c1_i32_0 = arith.constant 1 : i32
    %1 = arith.subi %0, %c1_i32_0 : i32
    %c0_i32 = arith.constant 0 : i32
    %2 = arith.maxsi %1, %c0_i32 : i32
    %c0_i32_1 = arith.constant 0 : i32
    %c0_i32_2 = arith.constant 0 : i32
    return %arg0, %c0_i32_1, %2 : i32, i32, i32
  }
  func.func @transform_2(%arg0: i32, %arg1: i32) -> (i32, i32, i32) {
    %c0_i32 = arith.constant 0 : i32
    %c0_i32_0 = arith.constant 0 : i32
    %c0_i32_1 = arith.constant 0 : i32
    %c0_i32_2 = arith.constant 0 : i32
    return %c0_i32, %c0_i32_0, %c0_i32_1 : i32, i32, i32
  }
  func.func @transform_3(%arg0: i32, %arg1: i32) -> (i32, i32) {
    %c0_i32 = arith.constant 0 : i32
    %c0_i32_0 = arith.constant 0 : i32
    %c0_i32_1 = arith.constant 0 : i32
    return %c0_i32, %c0_i32_0 : i32, i32
  }
  func.func @transform_4(%arg0: i32, %arg1: i32) -> (i32, i32, i32) {
    %c0_i32 = arith.constant 0 : i32
    %c0_i32_0 = arith.constant 0 : i32
    %c0_i32_1 = arith.constant 0 : i32
    %c0_i32_2 = arith.constant 0 : i32
    return %c0_i32, %c0_i32_0, %c0_i32_1 : i32, i32, i32
  }
  func.func @transform_5(%arg0: i32, %arg1: i32) -> (i32, i32) {
    %c0_i32 = arith.constant 0 : i32
    %c0_i32_0 = arith.constant 0 : i32
    %c0_i32_1 = arith.constant 0 : i32
    return %c0_i32, %c0_i32_0 : i32, i32
  }
  func.func @transform_6(%arg0: i32, %arg1: i32) -> (i32, i32) {
    %c0_i32 = arith.constant 0 : i32
    %c0_i32_0 = arith.constant 0 : i32
    %c0_i32_1 = arith.constant 0 : i32
    return %c0_i32, %c0_i32_0 : i32, i32
  }
  func.func @transform_7(%arg0: i32, %arg1: i32) -> (i32, i32) {
    %c0_i32 = arith.constant 0 : i32
    %c0_i32_0 = arith.constant 0 : i32
    %c0_i32_1 = arith.constant 0 : i32
    return %c0_i32, %c0_i32_0 : i32, i32
  }
  func.func @transform_8(%arg0: i32, %arg1: i32) -> (i32, i32, i32) {
    %c0_i32 = arith.constant 0 : i32
    %c0_i32_0 = arith.constant 0 : i32
    return %arg0, %c0_i32, %arg1 : i32, i32, i32
  }
}

</mosaic_0001>

<llo_original>
// kernel: tpu_custom_call.1
$region0: #{tpu_custom_call.1}
  #allocation0 [shape = 'u32[]', space=smem, size = 0x4, offset = 0x4, fixed_abs, tag = 'smem constant byte address 0x4 - core index']
  #allocation1 [shape = 'u32[144,128]{1,0:T(1,128)}', space=vmem, size = 0x12000, scoped, tag = 'internal scratch']
  %s0 = inlined_call_operand.vmem [shape: f32[2,8,128], index: 0, kind: input, shape index: {}]
  %s1 = inlined_call_operand.hbm [shape: f32[2,8,128], index: 1, kind: input, shape index: {}]
  %s2 = inlined_call_operand.vmem [shape: f32[2,8,8], index: 2, kind: input, shape index: {}]
  %s3 = inlined_call_operand.vmem [shape: f32[8,1], index: 3, kind: input, shape index: {}]
  %s4 = inlined_call_operand.hbm [shape: f32[2,8,8], index: 4, kind: input, shape index: {}]
  %s5 = inlined_call_operand.vmem [shape: f32[8,1], index: 5, kind: input, shape index: {}]
  %s6 = inlined_call_operand.vmem [shape: f32[8,8], index: 6, kind: input, shape index: {}]
  %s7 = inlined_call_operand.vmem [shape: f32[8,1], index: 7, kind: input, shape index: {}]
  %s8 = inlined_call_operand.hbm [shape: f32[2,8,128], index: 8, kind: output, shape index: {}]
  %s9 = sld [smem:[#allocation0]]
  $region73: #{tpu_custom_call.1} parent=0
    _
  %s11 = ssub.s32 1, %s9
  %s12 = scalar_select 0, %s11, %s9
  $region1: #{tpu_custom_call.1} parent=0
    #allocation2 [shape = 'u8[8192]{0}', space=vmem, size = 0x2000, scoped, tag = 'input window, operand 1']
    #allocation3 [shape = 's32[2]{0}', space=sflag, size = 0x8, scoped, tag = 'scoped memory for tpu_custom_call.1']
    #allocation4 [shape = 's32[2]{0}', space=sflag, size = 0x8, scoped, tag = 'scoped memory for tpu_custom_call.1']
    #allocation5 [shape = 'u8[8192]{0}', space=vmem, size = 0x2000, scoped, tag = 'input window, operand 4, single buffered']
    #allocation6 [shape = 's32[1]{0}', space=sflag, size = 0x4, scoped, tag = 'scoped memory for tpu_custom_call.1']
    #allocation7 [shape = 'u8[8192]{0}', space=vmem, size = 0x2000, scoped, tag = 'output window, operand 0']
    %13 = vsyncpa [#allocation3], 0
    %s14 = scalar_lea.sflag [#allocation3], 1
    %15 = vsyncpa %s14, 0
    %16 = vsyncpa [#allocation6], 0
    %17 = vsyncpa [#allocation4], 0
    %s18 = scalar_lea.sflag [#allocation4], 1
    %19 = vsyncpa %s18, 0
    loop: start=0, step=1, limit=4
    $region2: #{tpu_custom_call.1} parent=1 // loop_pre_header
      _
    $region3: #{tpu_custom_call.1} parent=1 // loop_header
      %s21 = sphi 0, %s25
      %p22 = scmp.ge.s32.totalorder %s21, 4
      %s28 = sphi 0, %s40
      %s29 = sphi 0, %s36
      %s30 = sphi 0, %s28
      %s31 = sphi 0, %s29
      %s32 = sphi 0, %s30
      %s33 = sphi 0, %s31
      %s45 = sphi 0, %s47
      %s48 = sphi 0, %s45
      %s49 = sphi 0, %s48
      %s65 = sphi 0, %s49
      %s79 = sphi 0, %s81
      %s82 = sphi 0, %s79
      %s83 = sphi 0, %s82
      %s99 = sphi 0, %s83
      %s103 = sphi 0, %s103
      %s105 = sphi 0, %s103
      %s106 = sphi 0, %s105
      %s120 = sphi 0, %s106
      %s124 = sphi 0, %s124
      %s126 = sphi 0, %s124
      %s127 = sphi 0, %s126
      %s141 = sphi 0, %s127
      %s145 = sphi 0, %s145
      %s147 = sphi 0, %s145
      %s148 = sphi 0, %s147
      %s162 = sphi 0, %s148
      %s166 = sphi 0, %s166
      %s168 = sphi 0, %s166
      %s169 = sphi 0, %s168
      %s183 = sphi 0, %s169
      %s187 = sphi 0, %s187
      %s189 = sphi 0, %s187
      %s190 = sphi 0, %s189
      %s204 = sphi 0, %s190
      %s208 = sphi 0, %s208
      %s210 = sphi 0, %s208
      %s211 = sphi 0, %s210
      %s225 = sphi 0, %s211
      %s233 = sphi 0, %s235
      %s236 = sphi 0, %s233
      %s237 = sphi 0, %s236
      %s253 = sphi 0, %s237
    $region4: #{tpu_custom_call.1} parent=1 // loop_header_branch
      %24 = sbr.rel (%p22) target = $region8
    $region5: #{tpu_custom_call.1} parent=1 // loop_body
      %s26 = ssub.s32 %s21, 1
      %s27 = ssub.s32 %s21, 2
      %s34 = sadd.s32 1, %s29
      %p35 = scmp.ge.s32.totalorder %s34, 1
      %s36 = scalar_select %p35, 0, %s34
      %s37 = sadd.s32 1, %s28
      %s38 = scalar_select %p35, %s37, %s28
      %p39 = scmp.ge.s32.totalorder %s38, 2
      %s40 = scalar_select %p39, 0, %s38
      %s41 = ssub.s32 %s28, %s40
      %s42 = ssub.s32 %s29, %s36
      %s43 = sor.u32 %s41, %s42
      %p44 = scmp.eq.s32.totalorder %s43, 0
      %s46 = sadd.s32 %s45, 1
      %s47 = scalar_select %p44, %s45, %s46
      %p50 = pneg %p44
      %p51 = scmp.eq.s32.totalorder %s21, 1
      %p52 = por %p50, %p51
      %p53 = scmp.ne.s32.totalorder %s45, %s48
      %p54 = scmp.eq.s32.totalorder %s21, 0
      %p55 = por %p53, %p54
      %p56 = scmp.ne.s32.totalorder %s45, %s48
      %p57 = scmp.eq.s32.totalorder %s26, 1
      %p58 = por %p56, %p57
      %p59 = scmp.ne.s32.totalorder %s48, %s49
      %p60 = scmp.eq.s32.totalorder %s26, 0
      %p61 = por %p59, %p60
      %p62 = scmp.ne.s32.totalorder %s48, %s49
      %p63 = scmp.eq.s32.totalorder %s27, 1
      %p64 = por %p62, %p63
      %p66 = scmp.ne.s32.totalorder %s49, %s65
      %p67 = scmp.eq.s32.totalorder %s27, 0
      %p68 = por %p66, %p67
      %s69 = ssub.s32 %s29, 1
      %p70 = scmp.gt.s32.totalorder %s69, 0
      %s71 = scalar_select %p70, %s69, 0
      %s72 = ssub.s32 %s36, 1
      %p73 = scmp.gt.s32.totalorder %s72, 0
      %s74 = scalar_select %p73, %s72, 0
      %s75 = ssub.s32 %s28, %s40
      %s76 = ssub.s32 %s71, %s74
      %s77 = sor.u32 %s75, %s76
      %p78 = scmp.eq.s32.totalorder %s77, 0
      %s80 = sadd.s32 %s79, 1
      %s81 = scalar_select %p78, %s79, %s80
      %p84 = pneg %p78
      %p85 = scmp.eq.s32.totalorder %s21, 1
      %p86 = por %p84, %p85
      %p87 = scmp.ne.s32.totalorder %s79, %s82
      %p88 = scmp.eq.s32.totalorder %s21, 0
      %p89 = por %p87, %p88
      %p90 = scmp.ne.s32.totalorder %s79, %s82
      %p91 = scmp.eq.s32.totalorder %s26, 1
      %p92 = por %p90, %p91
      %p93 = scmp.ne.s32.totalorder %s82, %s83
      %p94 = scmp.eq.s32.totalorder %s26, 0
      %p95 = por %p93, %p94
      %p96 = scmp.ne.s32.totalorder %s82, %s83
      %p97 = scmp.eq.s32.totalorder %s27, 1
      %p98 = por %p96, %p97
      %p100 = scmp.ne.s32.totalorder %s83, %s99
      %p101 = scmp.eq.s32.totalorder %s27, 0
      %p102 = por %p100, %p101
      %s104 = sadd.s32 %s103, 1
      %p107 = scmp.eq.s32.totalorder %s21, 1
      %p108 = scmp.ne.s32.totalorder %s103, %s105
      %p109 = scmp.eq.s32.totalorder %s21, 0
      %p110 = por %p108, %p109
      %p111 = scmp.ne.s32.totalorder %s103, %s105
      %p112 = scmp.eq.s32.totalorder %s26, 1
      %p113 = por %p111, %p112
      %p114 = scmp.ne.s32.totalorder %s105, %s106
      %p115 = scmp.eq.s32.totalorder %s26, 0
      %p116 = por %p114, %p115
      %p117 = scmp.ne.s32.totalorder %s105, %s106
      %p118 = scmp.eq.s32.totalorder %s27, 1
      %p119 = por %p117, %p118
      %p121 = scmp.ne.s32.totalorder %s106, %s120
      %p122 = scmp.eq.s32.totalorder %s27, 0
      %p123 = por %p121, %p122
      %s125 = sadd.s32 %s124, 1
      %p128 = scmp.eq.s32.totalorder %s21, 1
      %p129 = scmp.ne.s32.totalorder %s124, %s126
      %p130 = scmp.eq.s32.totalorder %s21, 0
      %p131 = por %p129, %p130
      %p132 = scmp.ne.s32.totalorder %s124, %s126
      %p133 = scmp.eq.s32.totalorder %s26, 1
      %p134 = por %p132, %p133
      %p135 = scmp.ne.s32.totalorder %s126, %s127
      %p136 = scmp.eq.s32.totalorder %s26, 0
      %p137 = por %p135, %p136
      %p138 = scmp.ne.s32.totalorder %s126, %s127
      %p139 = scmp.eq.s32.totalorder %s27, 1
      %p140 = por %p138, %p139
      %p142 = scmp.ne.s32.totalorder %s127, %s141
      %p143 = scmp.eq.s32.totalorder %s27, 0
      %p144 = por %p142, %p143
      %s146 = sadd.s32 %s145, 1
      %p149 = scmp.eq.s32.totalorder %s21, 1
      %p150 = scmp.ne.s32.totalorder %s145, %s147
      %p151 = scmp.eq.s32.totalorder %s21, 0
      %p152 = por %p150, %p151
      %p153 = scmp.ne.s32.totalorder %s145, %s147
      %p154 = scmp.eq.s32.totalorder %s26, 1
      %p155 = por %p153, %p154
      %p156 = scmp.ne.s32.totalorder %s147, %s148
      %p157 = scmp.eq.s32.totalorder %s26, 0
      %p158 = por %p156, %p157
      %p159 = scmp.ne.s32.totalorder %s147, %s148
      %p160 = scmp.eq.s32.totalorder %s27, 1
      %p161 = por %p159, %p160
      %p163 = scmp.ne.s32.totalorder %s148, %s162
      %p164 = scmp.eq.s32.totalorder %s27, 0
      %p165 = por %p163, %p164
      %s167 = sadd.s32 %s166, 1
      %p170 = scmp.eq.s32.totalorder %s21, 1
      %p171 = scmp.ne.s32.totalorder %s166, %s168
      %p172 = scmp.eq.s32.totalorder %s21, 0
      %p173 = por %p171, %p172
      %p174 = scmp.ne.s32.totalorder %s166, %s168
      %p175 = scmp.eq.s32.totalorder %s26, 1
      %p176 = por %p174, %p175
      %p177 = scmp.ne.s32.totalorder %s168, %s169
      %p178 = scmp.eq.s32.totalorder %s26, 0
      %p179 = por %p177, %p178
      %p180 = scmp.ne.s32.totalorder %s168, %s169
      %p181 = scmp.eq.s32.totalorder %s27, 1
      %p182 = por %p180, %p181
      %p184 = scmp.ne.s32.totalorder %s169, %s183
      %p185 = scmp.eq.s32.totalorder %s27, 0
      %p186 = por %p184, %p185
      %s188 = sadd.s32 %s187, 1
      %p191 = scmp.eq.s32.totalorder %s21, 1
      %p192 = scmp.ne.s32.totalorder %s187, %s189
      %p193 = scmp.eq.s32.totalorder %s21, 0
      %p194 = por %p192, %p193
      %p195 = scmp.ne.s32.totalorder %s187, %s189
      %p196 = scmp.eq.s32.totalorder %s26, 1
      %p197 = por %p195, %p196
      %p198 = scmp.ne.s32.totalorder %s189, %s190
      %p199 = scmp.eq.s32.totalorder %s26, 0
      %p200 = por %p198, %p199
      %p201 = scmp.ne.s32.totalorder %s189, %s190
      %p202 = scmp.eq.s32.totalorder %s27, 1
      %p203 = por %p201, %p202
      %p205 = scmp.ne.s32.totalorder %s190, %s204
      %p206 = scmp.eq.s32.totalorder %s27, 0
      %p207 = por %p205, %p206
      %s209 = sadd.s32 %s208, 1
      %p212 = scmp.eq.s32.totalorder %s21, 1
      %p213 = scmp.ne.s32.totalorder %s208, %s210
      %p214 = scmp.eq.s32.totalorder %s21, 0
      %p215 = por %p213, %p214
      %p216 = scmp.ne.s32.totalorder %s208, %s210
      %p217 = scmp.eq.s32.totalorder %s26, 1
      %p218 = por %p216, %p217
      %p219 = scmp.ne.s32.totalorder %s210, %s211
      %p220 = scmp.eq.s32.totalorder %s26, 0
      %p221 = por %p219, %p220
      %p222 = scmp.ne.s32.totalorder %s210, %s211
      %p223 = scmp.eq.s32.totalorder %s27, 1
      %p224 = por %p222, %p223
      %p226 = scmp.ne.s32.totalorder %s211, %s225
      %p227 = scmp.eq.s32.totalorder %s27, 0
      %p228 = por %p226, %p227
      %s229 = ssub.s32 %s28, %s40
      %s230 = ssub.s32 %s29, %s36
      %s231 = sor.u32 %s229, %s230
      %p232 = scmp.eq.s32.totalorder %s231, 0
      %s234 = sadd.s32 %s233, 1
      %s235 = scalar_select %p232, %s233, %s234
      %p238 = pneg %p232
      %p239 = scmp.eq.s32.totalorder %s21, 1
      %p240 = por %p238, %p239
      %p241 = scmp.ne.s32.totalorder %s233, %s236
      %p242 = scmp.eq.s32.totalorder %s21, 0
      %p243 = por %p241, %p242
      %p244 = scmp.ne.s32.totalorder %s233, %s236
      %p245 = scmp.eq.s32.totalorder %s26, 1
      %p246 = por %p244, %p245
      %p247 = scmp.ne.s32.totalorder %s236, %s237
      %p248 = scmp.eq.s32.totalorder %s26, 0
      %p249 = por %p247, %p248
      %p250 = scmp.ne.s32.totalorder %s236, %s237
      %p251 = scmp.eq.s32.totalorder %s27, 1
      %p252 = por %p250, %p251
      %p254 = scmp.ne.s32.totalorder %s237, %s253
      %p255 = scmp.eq.s32.totalorder %s27, 0
      %p256 = por %p254, %p255
      %p257 = scmp.le.s32.totalorder 1, %s21
      %p258 = scmp.lt.s32.totalorder %s21, 3
      %p259 = pnand %p257, %p258
      %p260 = pneg %p259
      // Predicated region
      $region9: #{tpu_custom_call.1} parent=5 // pred_check
        _
      $region10: #{tpu_custom_call.1} parent=5 // pred_check_branch
        %262 = sbr.rel (%p259) target = $region12
      $region11: #{tpu_custom_call.1} parent=5 // pred_region
        %s263 = ssub.s32 %s21, 1
        // Predicated region
        $region13: #{tpu_custom_call.1} parent=11 // pred_check
          %p264 = pneg %p116
        $region14: #{tpu_custom_call.1} parent=11 // pred_check_branch
          %266 = sbr.rel (%p264) target = $region16
        $region15: #{tpu_custom_call.1} parent=11 // pred_region
          _
        $region16: #{tpu_custom_call.1} parent=11 // pred_fallthru
          _
        // Predicated region
        $region17: #{tpu_custom_call.1} parent=11 // pred_check
          %p267 = pneg %p137
        $region18: #{tpu_custom_call.1} parent=11 // pred_check_branch
          %269 = sbr.rel (%p267) target = $region20
        $region19: #{tpu_custom_call.1} parent=11 // pred_region
          _
        $region20: #{tpu_custom_call.1} parent=11 // pred_fallthru
          _
        // Predicated region
        $region21: #{tpu_custom_call.1} parent=11 // pred_check
          %p270 = pneg %p158
        $region22: #{tpu_custom_call.1} parent=11 // pred_check_branch
          %272 = sbr.rel (%p270) target = $region24
        $region23: #{tpu_custom_call.1} parent=11 // pred_region
          %s274 = ssub.s32 256, 256
          %275 = vsyncadd [#allocation6], %s274
          %s276 = sshll.u32 [#allocation5], 4
          %s277 = int_to_ptr.vmem [resolvable:$true] %s276
          %282 = dma.hbm_to_vmem [thread:$0]  %s4, 256, %s277, [#allocation6], 128, 128, 8
        $region24: #{tpu_custom_call.1} parent=11 // pred_fallthru
          _
        // Predicated region
        $region25: #{tpu_custom_call.1} parent=11 // pred_check
          %p283 = pneg %p179
        $region26: #{tpu_custom_call.1} parent=11 // pred_check_branch
          %285 = sbr.rel (%p283) target = $region28
        $region27: #{tpu_custom_call.1} parent=11 // pred_region
          _
        $region28: #{tpu_custom_call.1} parent=11 // pred_fallthru
          _
        // Predicated region
        $region29: #{tpu_custom_call.1} parent=11 // pred_check
          %p286 = pneg %p200
        $region30: #{tpu_custom_call.1} parent=11 // pred_check_branch
          %288 = sbr.rel (%p286) target = $region32
        $region31: #{tpu_custom_call.1} parent=11 // pred_region
          _
        $region32: #{tpu_custom_call.1} parent=11 // pred_fallthru
          _
        // Predicated region
        $region33: #{tpu_custom_call.1} parent=11 // pred_check
          %p289 = pneg %p221
        $region34: #{tpu_custom_call.1} parent=11 // pred_check_branch
          %291 = sbr.rel (%p289) target = $region36
        $region35: #{tpu_custom_call.1} parent=11 // pred_region
          _
        $region36: #{tpu_custom_call.1} parent=11 // pred_fallthru
          _
      $region12: #{tpu_custom_call.1} parent=5 // pred_fallthru
        _
      %p292 = scmp.lt.s32.totalorder %s21, 2
      // Predicated region
      $region37: #{tpu_custom_call.1} parent=5 // pred_check
        %p293 = pneg %p292
      $region38: #{tpu_custom_call.1} parent=5 // pred_check_branch
        %295 = sbr.rel (%p293) target = $region40
      $region39: #{tpu_custom_call.1} parent=5 // pred_region
        // Predicated region
        $region41: #{tpu_custom_call.1} parent=39 // pred_check
          %p296 = pneg %p55
        $region42: #{tpu_custom_call.1} parent=39 // pred_check_branch
          %298 = sbr.rel (%p296) target = $region44
        $region43: #{tpu_custom_call.1} parent=39 // pred_region
          %p299 = scmp.lt.s32.totalorder %s28, 1
          %s300 = scalar_select %p299, %s28, 1
          %p301 = scmp.lt.s32.totalorder %s29, 0
          %s302 = scalar_select %p301, %s29, 0
          %s303 = sadd.s32 %s302, %s300
          %s304 = smul.addr %s303, 8
          %s305 = scalar_lea.vmem %s0, %s304
        $region44: #{tpu_custom_call.1} parent=39 // pred_fallthru
          _
        // Predicated region
        $region45: #{tpu_custom_call.1} parent=39 // pred_check
          %p306 = pneg %p89
        $region46: #{tpu_custom_call.1} parent=39 // pred_check_branch
          %308 = sbr.rel (%p306) target = $region48
        $region47: #{tpu_custom_call.1} parent=39 // pred_region
          %s309 = sand.u32 %s79, 1
          %s310 = scalar_lea.sflag [#allocation3], %s309
          %s311 = sand.u32 %s79, 1
          %s312 = smul.addr %s311, 8
          %s313 = scalar_lea.vmem [#allocation2], %s312
          %s314 = ssub.s32 %s29, 1
          %p315 = scmp.gt.s32.totalorder %s314, 0
          %s316 = scalar_select %p315, %s314, 0
          %s318 = ssub.s32 128, 128
          %319 = vsyncadd %s310, %s318
          %s320 = sadd.s32 %s316, %s28
          %s321 = smul.addr %s320, 128
          %s322 = scalar_lea.hbm %s1, %s321
          %s324 = sshll.u32 %s313, 4
          %s325 = int_to_ptr.vmem [resolvable:$true] %s324
          %327 = dma.hbm_to_vmem [thread:$0]  %s322, 128, %s325, %s310
        $region48: #{tpu_custom_call.1} parent=39 // pred_fallthru
          _
      $region40: #{tpu_custom_call.1} parent=5 // pred_fallthru
        _
      %p328 = scmp.le.s32.totalorder 1, %s21
      %p329 = scmp.lt.s32.totalorder %s21, 3
      %p330 = pnand %p328, %p329
      %p331 = pneg %p330
      // Predicated region
      $region49: #{tpu_custom_call.1} parent=5 // pred_check
        _
      $region50: #{tpu_custom_call.1} parent=5 // pred_check_branch
        %333 = sbr.rel (%p330) target = $region52
      $region51: #{tpu_custom_call.1} parent=5 // pred_region
        %s334 = ssub.s32 %s21, 1
        %s335 = sand.u32 %s82, 1
        %s336 = scalar_lea.sflag [#allocation3], %s335
        %s337 = sand.u32 %s82, 1
        %s338 = smul.addr %s337, 8
        %s339 = scalar_lea.vmem [#allocation2], %s338
        // Predicated region
        $region53: #{tpu_custom_call.1} parent=51 // pred_check
          %p340 = pneg %p95
        $region54: #{tpu_custom_call.1} parent=51 // pred_check_branch
          %342 = sbr.rel (%p340) target = $region56
        $region55: #{tpu_custom_call.1} parent=51 // pred_region
          %343 = dma.done %s336, 128
        $region56: #{tpu_custom_call.1} parent=51 // pred_fallthru
          _
        // Predicated region
        $region57: #{tpu_custom_call.1} parent=51 // pred_check
          %p344 = pneg %p158
        $region58: #{tpu_custom_call.1} parent=51 // pred_check_branch
          %346 = sbr.rel (%p344) target = $region60
        $region59: #{tpu_custom_call.1} parent=51 // pred_region
          %347 = dma.done [#allocation6], 256
        $region60: #{tpu_custom_call.1} parent=51 // pred_fallthru
          _
        %p348 = scmp.lt.s32.totalorder %s30, 1
        %s349 = scalar_select %p348, %s30, 1
        %p350 = scmp.lt.s32.totalorder %s31, 0
        %s351 = scalar_select %p350, %s31, 0
        %s352 = sadd.s32 %s351, %s349
        %s353 = smul.addr %s352, 8
        %s354 = scalar_lea.vmem %s0, %s353
        %p355 = pneg %p61
        %p356 = pneg %p58
        %s357 = sand.u32 %s82, 1
        %s358 = scalar_lea.sflag [#allocation3], %s357
        %s359 = sand.u32 %s82, 1
        %s360 = smul.addr %s359, 8
        %s361 = scalar_lea.vmem [#allocation2], %s360
        %p362 = pneg %p95
        %p363 = pneg %p92
        %p364 = pneg %p116
        %p365 = pneg %p113
        %p366 = pneg %p137
        %p367 = pneg %p134
        %p368 = pneg %p158
        %p369 = pneg %p155
        %p370 = pneg %p179
        %p371 = pneg %p176
        %p372 = pneg %p200
        %p373 = pneg %p197
        %p374 = pneg %p221
        %p375 = pneg %p218
        %p376 = pneg %p249
        %p377 = pneg %p246
        %s378 = sand.u32 %s236, 1
        %s379 = scalar_lea.sflag [#allocation4], %s378
        %s380 = sand.u32 %s236, 1
        %s381 = smul.addr %s380, 8
        %s382 = scalar_lea.vmem [#allocation7], %s381
        %p383 = scmp.lt.s32.totalorder %s30, 1
        %s384 = scalar_select %p383, %s30, 1
        %p385 = scmp.lt.s32.totalorder %s31, 0
        %s386 = scalar_select %p385, %s31, 0
        %s387 = sadd.s32 %s386, %s384
        %s388 = smul.addr %s387, 8
        %s389 = scalar_lea.vmem %s0, %s388
        %s390 = ssub.s32 %s31, 1
        %p391 = scmp.gt.s32.totalorder %s390, 0
        %s392 = scalar_select %p391, %s390, 0
        %v393 = vld [vmem:[%s389] sm:$0xff]
        %v394 = vld [vmem:[%s339] sm:$0xff]
        %p395 = scmp.gt.s32.totalorder %s31, 0
        %s396 = scalar_select %p395, 1, 0
        %v397 = vstv %s396
        %vm398 = vcmp.eq.s32.totalorder %v397, 1
        %v399 = vsel %vm398, %v394, 0.0
        %v400 = vld [vmem:[%s2] sm:$0xff]
        %s401 = scalar_lea.vmem %s2, 8
        %v402 = vld [vmem:[%s401] sm:$0xff]
        %405 = vrot.lane.b32.xlu0 %v399, 1
        %v406 = vpop.permute.xlu0 %405
        %407 = vrot.lane.b32.xlu0 %v393, 1
        %v408 = vpop.permute.xlu0 %407
        %vm409 = vcmask 7168
        %v410 = vsel %vm409, %v406, %v408
        %vm413 = vcmask 64512
        %v415 = vsel %vm413, %v402, 0
        %417 = vmatprep.subr.mxu0 %v408
        %418 = vmatpush1.msra.mxu0 %v410
        %419 = vmatprep.subr.mxu0 0.0
        %420 = vmatpush1.msra.mxu0 0.0
        %421 = vmatprep.subr.mxu0 0.0
        %422 = vmatpush1.msra.mxu0 0.0
        %423 = vmatprep.subr.mxu0 0.0
        %424 = vmatpush1.msra.mxu0 0.0
        %425 = vmatprep.subr.mxu0 0.0
        %426 = vmatpush1.msra.mxu0 0.0
        %427 = vmatprep.subr.mxu0 0.0
        %428 = vmatpush1.msra.mxu0 0.0
        %429 = vmatprep.subr.mxu0 0.0
        %430 = vmatpush1.msra.mxu0 0.0
        %431 = vmatprep.subr.mxu0 0.0
        %432 = vmatpush1.msra.mxu0 0.0
        %433 = vmatprep.subr.mxu0 0.0
        %434 = vmatpush1.msra.mxu0 0.0
        %435 = vmatprep.subr.mxu0 0.0
        %436 = vmatpush1.msra.mxu0 0.0
        %437 = vmatprep.subr.mxu0 0.0
        %438 = vmatpush1.msra.mxu0 0.0
        %439 = vmatprep.subr.mxu0 0.0
        %440 = vmatpush1.msra.mxu0 0.0
        %441 = vmatprep.subr.mxu0 0.0
        %442 = vmatpush1.msra.mxu0 0.0
        %443 = vmatprep.subr.mxu0 0.0
        %444 = vmatpush1.msra.mxu0 0.0
        %445 = vmatprep.subr.mxu0 0.0
        %446 = vmatpush1.msra.mxu0 0.0
        %447 = vmatprep.subr.mxu0 0.0
        %448 = vmatpush1.msra.mxu0 0.0
        %449 = vmatprep.subr.mxu0 0.0
        %450 = vmatpush1.msra.mxu0 0.0
        %451 = vmatprep.subr.mxu0 0.0
        %452 = vmatpush1.msra.mxu0 0.0
        %453 = vmatprep.subr.mxu0 0.0
        %454 = vmatpush1.msra.mxu0 0.0
        %455 = vmatprep.subr.mxu0 0.0
        %456 = vmatpush1.msra.mxu0 0.0
        %457 = vmatprep.subr.mxu0 0.0
        %458 = vmatpush1.msra.mxu0 0.0
        %459 = vmatprep.subr.mxu0 0.0
        %460 = vmatpush1.msra.mxu0 0.0
        %461 = vmatprep.subr.mxu0 0.0
        %462 = vmatpush1.msra.mxu0 0.0
        %463 = vmatprep.subr.mxu0 0.0
        %464 = vmatpush1.msra.mxu0 0.0
        %465 = vmatprep.subr.mxu0 0.0
        %466 = vmatpush1.msra.mxu0 0.0
        %467 = vmatprep.subr.mxu0 0.0
        %468 = vmatpush1.msra.mxu0 0.0
        %469 = vmatprep.subr.mxu0 0.0
        %470 = vmatpush1.msra.mxu0 0.0
        %471 = vmatprep.subr.mxu0 0.0
        %472 = vmatpush1.msra.mxu0 0.0
        %473 = vmatprep.subr.mxu0 0.0
        %474 = vmatpush1.msra.mxu0 0.0
        %475 = vmatprep.subr.mxu0 0.0
        %476 = vmatpush1.msra.mxu0 0.0
        %477 = vmatprep.subr.mxu0 0.0
        %478 = vmatpush1.msra.mxu0 0.0
        %479 = vmatprep.subr.mxu0 0.0
        %480 = vmatpush1.msra.mxu0 0.0
        %481 = vmatprep.mubr.f32.mxu0 0.0
        %482 = vmatmul.mubr.f32.gmra.mrb[0].mxu0 %v415
        %v483 = vpop.f32.mrb[0].mxu0
        %v484 = vadd.f32 0.0, %v483
        %v485 = vpop.f32.mrb[0].mxu0
        %v486 = vadd.f32 0.0, %v485
        %487 = vdwg.mxu0
        %488 = vrot.lane.b32.xlu0 %v399, 2
        %v489 = vpop.permute.xlu0 %488
        %490 = vrot.lane.b32.xlu0 %v393, 2
        %v491 = vpop.permute.xlu0 %490
        %vm492 = vcmask 15360
        %v493 = vsel %vm492, %v489, %v491
        %v497 = vsel %vm413, %v400, 0
        %499 = vmatprep.subr.mxu0 %v491
        %500 = vmatpush1.msra.mxu0 %v493
        %501 = vmatprep.subr.mxu0 0.0
        %502 = vmatpush1.msra.mxu0 0.0
        %503 = vmatprep.subr.mxu0 0.0
        %504 = vmatpush1.msra.mxu0 0.0
        %505 = vmatprep.subr.mxu0 0.0
        %506 = vmatpush1.msra.mxu0 0.0
        %507 = vmatprep.subr.mxu0 0.0
        %508 = vmatpush1.msra.mxu0 0.0
        %509 = vmatprep.subr.mxu0 0.0
        %510 = vmatpush1.msra.mxu0 0.0
        %511 = vmatprep.subr.mxu0 0.0
        %512 = vmatpush1.msra.mxu0 0.0
        %513 = vmatprep.subr.mxu0 0.0
        %514 = vmatpush1.msra.mxu0 0.0
        %515 = vmatprep.subr.mxu0 0.0
        %516 = vmatpush1.msra.mxu0 0.0
        %517 = vmatprep.subr.mxu0 0.0
        %518 = vmatpush1.msra.mxu0 0.0
        %519 = vmatprep.subr.mxu0 0.0
        %520 = vmatpush1.msra.mxu0 0.0
        %521 = vmatprep.subr.mxu0 0.0
        %522 = vmatpush1.msra.mxu0 0.0
        %523 = vmatprep.subr.mxu0 0.0
        %524 = vmatpush1.msra.mxu0 0.0
        %525 = vmatprep.subr.mxu0 0.0
        %526 = vmatpush1.msra.mxu0 0.0
        %527 = vmatprep.subr.mxu0 0.0
        %528 = vmatpush1.msra.mxu0 0.0
        %529 = vmatprep.subr.mxu0 0.0
        %530 = vmatpush1.msra.mxu0 0.0
        %531 = vmatprep.subr.mxu0 0.0
        %532 = vmatpush1.msra.mxu0 0.0
        %533 = vmatprep.subr.mxu0 0.0
        %534 = vmatpush1.msra.mxu0 0.0
        %535 = vmatprep.subr.mxu0 0.0
        %536 = vmatpush1.msra.mxu0 0.0
        %537 = vmatprep.subr.mxu0 0.0
        %538 = vmatpush1.msra.mxu0 0.0
        %539 = vmatprep.subr.mxu0 0.0
        %540 = vmatpush1.msra.mxu0 0.0
        %541 = vmatprep.subr.mxu0 0.0
        %542 = vmatpush1.msra.mxu0 0.0
        %543 = vmatprep.subr.mxu0 0.0
        %544 = vmatpush1.msra.mxu0 0.0
        %545 = vmatprep.subr.mxu0 0.0
        %546 = vmatpush1.msra.mxu0 0.0
        %547 = vmatprep.subr.mxu0 0.0
        %548 = vmatpush1.msra.mxu0 0.0
        %549 = vmatprep.subr.mxu0 0.0
        %550 = vmatpush1.msra.mxu0 0.0
        %551 = vmatprep.subr.mxu0 0.0
        %552 = vmatpush1.msra.mxu0 0.0
        %553 = vmatprep.subr.mxu0 0.0
        %554 = vmatpush1.msra.mxu0 0.0
        %555 = vmatprep.subr.mxu0 0.0
        %556 = vmatpush1.msra.mxu0 0.0
        %557 = vmatprep.subr.mxu0 0.0
        %558 = vmatpush1.msra.mxu0 0.0
        %559 = vmatprep.subr.mxu0 0.0
        %560 = vmatpush1.msra.mxu0 0.0
        %561 = vmatprep.subr.mxu0 0.0
        %562 = vmatpush1.msra.mxu0 0.0
        %563 = vmatprep.mubr.f32.mxu0 0.0
        %564 = vmatmul.mubr.f32.gmra.mrb[0].mxu0 %v497
        %v565 = vpop.f32.mrb[0].mxu0
        %v566 = vadd.f32 %v484, %v565
        %v567 = vpop.f32.mrb[0].mxu0
        %v568 = vadd.f32 %v486, %v567
        %569 = vdwg.mxu0
        %v570 = vld [vmem:[%s3] sm:$0xff]
        %572 = vset.pattern.permute.xlu0 0
        %573 = vperm.xlu0 %572, %v570
        %v574 = vpop.permute.xlu0 %573
        %v576 = vadd.f32 %v566, %v574
        %v577 = vadd.f32 %v568, %v574
        %v578 = vmax.f32 %v576, 0.0
        %v579 = vmax.f32 %v577, 0.0
        %v580 = vlaneseq
        %v581 = vand.u32 %v580, 127
        %v582 = vadd.s32 %v581, 128
        %vm583 = vcmp.ge.s32.totalorder %v581, 1
        %vm584 = vcmp.ge.s32.totalorder %v582, 1
        %vm585 = vmor %vm398, %vm583
        %vm586 = vmor %vm398, %vm584
        %v587 = vsel %vm585, %v578, 0.0
        %v588 = vsel %vm586, %v579, 0.0
        %v589 = vld [vmem:[#allocation5] sm:$0xff]
        %s590 = scalar_lea.vmem [#allocation5], 8
        %v591 = vld [vmem:[%s590] sm:$0xff]
        %594 = vrot.lane.b32.xlu0 %v587, 127
        %v595 = vpop.permute.xlu0 %594
        %596 = vrot.lane.b32.xlu0 %v588, 127
        %v597 = vpop.permute.xlu0 %596
        %vm598 = vcmask 1039360
        %v599 = vsel %vm598, %v595, %v597
        %v602 = vsel %vm413, %v591, 0
        %604 = vmatprep.subr.mxu0 0.0
        %605 = vmatpush1.msra.mxu0 %v599
        %606 = vmatprep.subr.mxu0 0.0
        %607 = vmatpush1.msra.mxu0 0.0
        %608 = vmatprep.subr.mxu0 0.0
        %609 = vmatpush1.msra.mxu0 0.0
        %610 = vmatprep.subr.mxu0 0.0
        %611 = vmatpush1.msra.mxu0 0.0
        %612 = vmatprep.subr.mxu0 0.0
        %613 = vmatpush1.msra.mxu0 0.0
        %614 = vmatprep.subr.mxu0 0.0
        %615 = vmatpush1.msra.mxu0 0.0
        %616 = vmatprep.subr.mxu0 0.0
        %617 = vmatpush1.msra.mxu0 0.0
        %618 = vmatprep.subr.mxu0 0.0
        %619 = vmatpush1.msra.mxu0 0.0
        %620 = vmatprep.subr.mxu0 0.0
        %621 = vmatpush1.msra.mxu0 0.0
        %622 = vmatprep.subr.mxu0 0.0
        %623 = vmatpush1.msra.mxu0 0.0
        %624 = vmatprep.subr.mxu0 0.0
        %625 = vmatpush1.msra.mxu0 0.0
        %626 = vmatprep.subr.mxu0 0.0
        %627 = vmatpush1.msra.mxu0 0.0
        %628 = vmatprep.subr.mxu0 0.0
        %629 = vmatpush1.msra.mxu0 0.0
        %630 = vmatprep.subr.mxu0 0.0
        %631 = vmatpush1.msra.mxu0 0.0
        %632 = vmatprep.subr.mxu0 0.0
        %633 = vmatpush1.msra.mxu0 0.0
        %634 = vmatprep.subr.mxu0 0.0
        %635 = vmatpush1.msra.mxu0 0.0
        %636 = vmatprep.subr.mxu0 0.0
        %637 = vmatpush1.msra.mxu0 0.0
        %638 = vmatprep.subr.mxu0 0.0
        %639 = vmatpush1.msra.mxu0 0.0
        %640 = vmatprep.subr.mxu0 0.0
        %641 = vmatpush1.msra.mxu0 0.0
        %642 = vmatprep.subr.mxu0 0.0
        %643 = vmatpush1.msra.mxu0 0.0
        %644 = vmatprep.subr.mxu0 0.0
        %645 = vmatpush1.msra.mxu0 0.0
        %646 = vmatprep.subr.mxu0 0.0
        %647 = vmatpush1.msra.mxu0 0.0
        %648 = vmatprep.subr.mxu0 0.0
        %649 = vmatpush1.msra.mxu0 0.0
        %650 = vmatprep.subr.mxu0 0.0
        %651 = vmatpush1.msra.mxu0 0.0
        %652 = vmatprep.subr.mxu0 0.0
        %653 = vmatpush1.msra.mxu0 0.0
        %654 = vmatprep.subr.mxu0 0.0
        %655 = vmatpush1.msra.mxu0 0.0
        %656 = vmatprep.subr.mxu0 0.0
        %657 = vmatpush1.msra.mxu0 0.0
        %658 = vmatprep.subr.mxu0 0.0
        %659 = vmatpush1.msra.mxu0 0.0
        %660 = vmatprep.subr.mxu0 0.0
        %661 = vmatpush1.msra.mxu0 0.0
        %662 = vmatprep.subr.mxu0 0.0
        %663 = vmatpush1.msra.mxu0 0.0
        %664 = vmatprep.subr.mxu0 0.0
        %665 = vmatpush1.msra.mxu0 0.0
        %666 = vmatprep.subr.mxu0 0.0
        %667 = vmatpush1.msra.mxu0 0.0
        %668 = vmatprep.mubr.f32.mxu0 0.0
        %669 = vmatmul.mubr.f32.gmra.mrb[0].mxu0 %v602
        %v670 = vpop.f32.mrb[0].mxu0
        %v671 = vadd.f32 0.0, %v670
        %v672 = vpop.f32.mrb[0].mxu0
        %673 = vdwg.mxu0
        %v675 = vsel %vm413, %v589, 0
        %677 = vmatprep.subr.mxu0 0.0
        %678 = vmatpush1.msra.mxu0 %v587
        %679 = vmatprep.subr.mxu0 0.0
        %680 = vmatpush1.msra.mxu0 0.0
        %681 = vmatprep.subr.mxu0 0.0
        %682 = vmatpush1.msra.mxu0 0.0
        %683 = vmatprep.subr.mxu0 0.0
        %684 = vmatpush1.msra.mxu0 0.0
        %685 = vmatprep.subr.mxu0 0.0
        %686 = vmatpush1.msra.mxu0 0.0
        %687 = vmatprep.subr.mxu0 0.0
        %688 = vmatpush1.msra.mxu0 0.0
        %689 = vmatprep.subr.mxu0 0.0
        %690 = vmatpush1.msra.mxu0 0.0
        %691 = vmatprep.subr.mxu0 0.0
        %692 = vmatpush1.msra.mxu0 0.0
        %693 = vmatprep.subr.mxu0 0.0
        %694 = vmatpush1.msra.mxu0 0.0
        %695 = vmatprep.subr.mxu0 0.0
        %696 = vmatpush1.msra.mxu0 0.0
        %697 = vmatprep.subr.mxu0 0.0
        %698 = vmatpush1.msra.mxu0 0.0
        %699 = vmatprep.subr.mxu0 0.0
        %700 = vmatpush1.msra.mxu0 0.0
        %701 = vmatprep.subr.mxu0 0.0
        %702 = vmatpush1.msra.mxu0 0.0
        %703 = vmatprep.subr.mxu0 0.0
        %704 = vmatpush1.msra.mxu0 0.0
        %705 = vmatprep.subr.mxu0 0.0
        %706 = vmatpush1.msra.mxu0 0.0
        %707 = vmatprep.subr.mxu0 0.0
        %708 = vmatpush1.msra.mxu0 0.0
        %709 = vmatprep.subr.mxu0 0.0
        %710 = vmatpush1.msra.mxu0 0.0
        %711 = vmatprep.subr.mxu0 0.0
        %712 = vmatpush1.msra.mxu0 0.0
        %713 = vmatprep.subr.mxu0 0.0
        %714 = vmatpush1.msra.mxu0 0.0
        %715 = vmatprep.subr.mxu0 0.0
        %716 = vmatpush1.msra.mxu0 0.0
        %717 = vmatprep.subr.mxu0 0.0
        %718 = vmatpush1.msra.mxu0 0.0
        %719 = vmatprep.subr.mxu0 0.0
        %720 = vmatpush1.msra.mxu0 0.0
        %721 = vmatprep.subr.mxu0 0.0
        %722 = vmatpush1.msra.mxu0 0.0
        %723 = vmatprep.subr.mxu0 0.0
        %724 = vmatpush1.msra.mxu0 0.0
        %725 = vmatprep.subr.mxu0 0.0
        %726 = vmatpush1.msra.mxu0 0.0
        %727 = vmatprep.subr.mxu0 0.0
        %728 = vmatpush1.msra.mxu0 0.0
        %729 = vmatprep.subr.mxu0 0.0
        %730 = vmatpush1.msra.mxu0 0.0
        %731 = vmatprep.subr.mxu0 0.0
        %732 = vmatpush1.msra.mxu0 0.0
        %733 = vmatprep.subr.mxu0 0.0
        %734 = vmatpush1.msra.mxu0 0.0
        %735 = vmatprep.subr.mxu0 0.0
        %736 = vmatpush1.msra.mxu0 0.0
        %737 = vmatprep.subr.mxu0 0.0
        %738 = vmatpush1.msra.mxu0 0.0
        %739 = vmatprep.subr.mxu0 0.0
        %740 = vmatpush1.msra.mxu0 0.0
        %741 = vmatprep.mubr.f32.mxu0 0.0
        %742 = vmatmul.mubr.f32.gmra.mrb[0].mxu0 %v675
        %v743 = vpop.f32.mrb[0].mxu0
        %v744 = vadd.f32 %v671, %v743
        %v745 = vpop.f32.mrb[0].mxu0
        %746 = vdwg.mxu0
        %v747 = vld [vmem:[%s5] sm:$0xff]
        %749 = vset.pattern.permute.xlu0 0
        %750 = vperm.xlu0 %749, %v747
        %v751 = vpop.permute.xlu0 %750
        %v753 = vadd.f32 %v744, %v751
        %v754 = vmax.f32 %v753, 0.0
        %v755 = vld [vmem:[%s6] sm:$0xff]
        %v756 = vld [vmem:[%s7] sm:$0xff]
        %758 = vset.pattern.permute.xlu0 0
        %759 = vperm.xlu0 %758, %v756
        %v760 = vpop.permute.xlu0 %759
        %v763 = vsel %vm413, %v755, 0
        %765 = vmatprep.subr.mxu0 0.0
        %766 = vmatpush1.msra.mxu0 %v393
        %767 = vmatprep.subr.mxu0 0.0
        %768 = vmatpush1.msra.mxu0 0.0
        %769 = vmatprep.subr.mxu0 0.0
        %770 = vmatpush1.msra.mxu0 0.0
        %771 = vmatprep.subr.mxu0 0.0
        %772 = vmatpush1.msra.mxu0 0.0
        %773 = vmatprep.subr.mxu0 0.0
        %774 = vmatpush1.msra.mxu0 0.0
        %775 = vmatprep.subr.mxu0 0.0
        %776 = vmatpush1.msra.mxu0 0.0
        %777 = vmatprep.subr.mxu0 0.0
        %778 = vmatpush1.msra.mxu0 0.0
        %779 = vmatprep.subr.mxu0 0.0
        %780 = vmatpush1.msra.mxu0 0.0
        %781 = vmatprep.subr.mxu0 0.0
        %782 = vmatpush1.msra.mxu0 0.0
        %783 = vmatprep.subr.mxu0 0.0
        %784 = vmatpush1.msra.mxu0 0.0
        %785 = vmatprep.subr.mxu0 0.0
        %786 = vmatpush1.msra.mxu0 0.0
        %787 = vmatprep.subr.mxu0 0.0
        %788 = vmatpush1.msra.mxu0 0.0
        %789 = vmatprep.subr.mxu0 0.0
        %790 = vmatpush1.msra.mxu0 0.0
        %791 = vmatprep.subr.mxu0 0.0
        %792 = vmatpush1.msra.mxu0 0.0
        %793 = vmatprep.subr.mxu0 0.0
        %794 = vmatpush1.msra.mxu0 0.0
        %795 = vmatprep.subr.mxu0 0.0
        %796 = vmatpush1.msra.mxu0 0.0
        %797 = vmatprep.subr.mxu0 0.0
        %798 = vmatpush1.msra.mxu0 0.0
        %799 = vmatprep.subr.mxu0 0.0
        %800 = vmatpush1.msra.mxu0 0.0
        %801 = vmatprep.subr.mxu0 0.0
        %802 = vmatpush1.msra.mxu0 0.0
        %803 = vmatprep.subr.mxu0 0.0
        %804 = vmatpush1.msra.mxu0 0.0
        %805 = vmatprep.subr.mxu0 0.0
        %806 = vmatpush1.msra.mxu0 0.0
        %807 = vmatprep.subr.mxu0 0.0
        %808 = vmatpush1.msra.mxu0 0.0
        %809 = vmatprep.subr.mxu0 0.0
        %810 = vmatpush1.msra.mxu0 0.0
        %811 = vmatprep.subr.mxu0 0.0
        %812 = vmatpush1.msra.mxu0 0.0
        %813 = vmatprep.subr.mxu0 0.0
        %814 = vmatpush1.msra.mxu0 0.0
        %815 = vmatprep.subr.mxu0 0.0
        %816 = vmatpush1.msra.mxu0 0.0
        %817 = vmatprep.subr.mxu0 0.0
        %818 = vmatpush1.msra.mxu0 0.0
        %819 = vmatprep.subr.mxu0 0.0
        %820 = vmatpush1.msra.mxu0 0.0
        %821 = vmatprep.subr.mxu0 0.0
        %822 = vmatpush1.msra.mxu0 0.0
        %823 = vmatprep.subr.mxu0 0.0
        %824 = vmatpush1.msra.mxu0 0.0
        %825 = vmatprep.subr.mxu0 0.0
        %826 = vmatpush1.msra.mxu0 0.0
        %827 = vmatprep.subr.mxu0 0.0
        %828 = vmatpush1.msra.mxu0 0.0
        %829 = vmatprep.mubr.f32.mxu0 0.0
        %830 = vmatmul.mubr.f32.gmra.mrb[0].mxu0 %v763
        %v831 = vpop.f32.mrb[0].mxu0
        %v832 = vadd.f32 %v760, %v831
        %v833 = vpop.f32.mrb[0].mxu0
        %834 = vdwg.mxu0
        %v835 = vadd.f32 %v754, %v832
        %v836 = vmax.f32 %v835, 0.0
        %837 = vst [vmem:[%s382] sm:$0xff] %v836
        %s838 = sand.u32 %s236, 1
        %s839 = scalar_lea.sflag [#allocation4], %s838
        %s840 = sand.u32 %s236, 1
        %s841 = smul.addr %s840, 8
        %s842 = scalar_lea.vmem [#allocation7], %s841
        // Predicated region
        $region61: #{tpu_custom_call.1} parent=51 // pred_check
          %p843 = pneg %p246
        $region62: #{tpu_custom_call.1} parent=51 // pred_check_branch
          %845 = sbr.rel (%p843) target = $region64
        $region63: #{tpu_custom_call.1} parent=51 // pred_region
          %s847 = ssub.s32 128, 128
          %848 = vsyncadd %s839, %s847
          %s849 = sadd.s32 %s31, %s30
          %s850 = smul.addr %s849, 128
          %s851 = scalar_lea.hbm %s8, %s850
          %s853 = sshll.u32 %s842, 4
          %s854 = int_to_ptr.vmem [resolvable:$true] %s853
          %856 = dma.vmem_to_hbm [thread:$0]  %s854, 128, %s851, %s839
        $region64: #{tpu_custom_call.1} parent=51 // pred_fallthru
          _
      $region52: #{tpu_custom_call.1} parent=5 // pred_fallthru
        _
      %p857 = scmp.le.s32.totalorder 2, %s21
      // Predicated region
      $region65: #{tpu_custom_call.1} parent=5 // pred_check
        %p858 = pneg %p857
      $region66: #{tpu_custom_call.1} parent=5 // pred_check_branch
        %860 = sbr.rel (%p858) target = $region68
      $region67: #{tpu_custom_call.1} parent=5 // pred_region
        %s861 = ssub.s32 %s21, 2
        // Predicated region
        $region69: #{tpu_custom_call.1} parent=67 // pred_check
          %p862 = pneg %p252
        $region70: #{tpu_custom_call.1} parent=67 // pred_check_branch
          %864 = sbr.rel (%p862) target = $region72
        $region71: #{tpu_custom_call.1} parent=67 // pred_region
          %s865 = sand.u32 %s237, 1
          %s866 = scalar_lea.sflag [#allocation4], %s865
          %s867 = sand.u32 %s237, 1
          %s868 = smul.addr %s867, 8
          %s869 = scalar_lea.vmem [#allocation7], %s868
          %870 = dma.done %s866, 128
        $region72: #{tpu_custom_call.1} parent=67 // pred_fallthru
          _
      $region68: #{tpu_custom_call.1} parent=5 // pred_fallthru
        _
    $region6: #{tpu_custom_call.1} parent=1 // loop_footer
      %s25 = sadd.s32 1, %s21
    $region7: #{tpu_custom_call.1} parent=1 // loop_footer_branch
      %20 = sbr.rel target = $region3
    $region8: #{tpu_custom_call.1} parent=1 // loop_exit
      _
    %871 = vsyncpa [#allocation3], 1
    %s872 = scalar_lea.sflag [#allocation3], 1
    %873 = vsyncpa %s872, 1
    %874 = vsyncpa [#allocation6], 1
    %875 = vsyncpa [#allocation4], 1
    %s876 = scalar_lea.sflag [#allocation4], 1
    %877 = vsyncpa %s876, 1

</llo_original>
